<compile_context>
chip_gen: v7x
topology: tpu7x:2x2x1
jax: 0.10.0
libtpu: 0.0.40
codegen_flags: <defaults>
</compile_context>

<pallas_src>
import jax
import jax.numpy as jnp
import numpy as np
from jax.experimental import pallas as pl
from jax.experimental.pallas import tpu as pltpu


def channel_gate_kernel(x_ref, w1_ref, b1_ref, w2t_ref, b2_ref, o_ref):
    # x_ref / o_ref : (C, HW)   channels on sublanes, flat spatial on lanes.
    # w1_ref        : (C, hidden)   first Linear weight (in, out).
    # b1_ref        : (1, hidden)
    # w2t_ref       : (C, hidden)   second Linear weight, pre-transposed.
    # b2_ref        : (C, 1)
    x = x_ref[...]
    xf = x.astype(jnp.float32)

    # Global spatial pooling: per-channel lane (XLU) reductions.
    avg = jnp.mean(xf, axis=1, keepdims=True)   # (C, 1)
    mx = jnp.max(xf, axis=1, keepdims=True)     # (C, 1)

    w1 = w1_ref[...]
    b1 = b1_ref[...]
    w2t = w2t_ref[...]
    b2 = b2_ref[...]

    # First Linear on VPU + sublane reduce (MXU pointless at M=1, N=hidden).
    h_avg = jnp.sum(w1 * avg, axis=0, keepdims=True)                  # (1, hidden)
    h_max = jnp.sum(w1 * mx, axis=0, keepdims=True)                   # (1, hidden)
    h = jnp.maximum(h_avg + b1, 0.0) + jnp.maximum(h_max + b1, 0.0)   # (1, hidden)

    # Second Linear, summed over both branches (bias b2 appears once per branch).
    att = jnp.sum(w2t * h, axis=1, keepdims=True) + 2.0 * b2          # (C, 1)

    scale = jax.nn.sigmoid(att)                                       # (C, 1)
    # Lane-dense store: last dim is HW.
    o_ref[...] = (xf * scale).astype(o_ref.dtype)


def channel_gate(x_nchw, w1, b1, w2, b2):
    """ChannelGate forward.

    x_nchw: (B, C, H, W), float32 or bfloat16.
    w1: (C, hidden), b1: (hidden,), w2: (hidden, C), b2: (C,)
    (JAX convention y = x @ w + b, i.e. PyTorch nn.Linear weights transposed.)
    Returns (B, C, H, W) in x's dtype.
    """
    B, C, H, W = x_nchw.shape
    HW = H * W
    hidden = w1.shape[1]

    # Free view of contiguous NCHW -- no transpose, no extra HBM pass.
    x_kern = x_nchw.reshape(B, C, HW)
    w1_f = w1.astype(jnp.float32)                      # (C, hidden)
    b1_2d = b1.reshape(1, hidden).astype(jnp.float32)  # (1, hidden)
    w2t = jnp.transpose(w2).astype(jnp.float32)        # (C, hidden), tiny one-time transpose
    b2_col = b2.reshape(C, 1).astype(jnp.float32)      # (C, 1)

    # VMEM budget guard (in + out blocks, double buffered, + tiny weights).
    block_bytes = C * HW * x_kern.dtype.itemsize
    est_vmem = 4 * block_bytes + 4 * (2 * C * hidden + hidden + C) + (1 << 20)
    params = {"dimension_semantics": ("parallel",)}
    if est_vmem > (32 << 20):
        # TODO(synk): for very large feature maps, tile H*W with running
        # sum/max scratch (two-pass) instead of just raising the VMEM limit.
        params["vmem_limit_bytes"] = min(est_vmem, 100 << 20)

    out_kern = pl.pallas_call(
        channel_gate_kernel,
        out_shape=jax.ShapeDtypeStruct((B, C, HW), x_kern.dtype),
        grid_spec=pltpu.PrefetchScalarGridSpec(
            num_scalar_prefetch=0,
            grid=(B,),
            in_specs=[
                pl.BlockSpec((pl.Squeezed(), C, HW), lambda b: (b, 0, 0)),  # x
                pl.BlockSpec((C, hidden), lambda b: (0, 0)),                # w1
                pl.BlockSpec((1, hidden), lambda b: (0, 0)),                # b1
                pl.BlockSpec((C, hidden), lambda b: (0, 0)),                # w2^T
                pl.BlockSpec((C, 1), lambda b: (0, 0)),                     # b2
            ],
            out_specs=pl.BlockSpec((pl.Squeezed(), C, HW), lambda b: (b, 0, 0)),
        ),
        input_output_aliases={0: 0},  # out has x_kern's shape/dtype
        compiler_params=pltpu.CompilerParams(**params),
    )(x_kern, w1_f, b1_2d, w2t, b2_col)

    return out_kern.reshape(B, C, H, W)


def channel_gate_ref(x_nchw, w1, b1, w2, b2):
    """Pure-JAX reference mirroring the PyTorch forward."""
    B, C, H, W = x_nchw.shape
    flat = x_nchw.astype(jnp.float32).reshape(B, C, H * W)
    avg_pool = jnp.mean(flat, axis=2)  # (B, C)
    max_pool = jnp.max(flat, axis=2)   # (B, C)

    def mlp(p):
        h = jnp.maximum(p @ w1 + b1, 0.0)
        return h @ w2 + b2

    att = mlp(avg_pool) + mlp(max_pool)
    scale = jax.nn.sigmoid(att)[:, :, None, None]
    return (x_nchw.astype(jnp.float32) * scale).astype(x_nchw.dtype)


if __name__ == "__main__":
    # Small shapes consistent with the module: gate_channels=32, reduction=16.
    B, C, H, W = 2, 32, 16, 16
    reduction_ratio = 16
    hidden = C // reduction_ratio  # 2

    key = jax.random.PRNGKey(0)
    kx, k1, k2, k3, k4 = jax.random.split(key, 5)

    x = jax.random.normal(kx, (B, C, H, W), dtype=jnp.float32)

    # Deterministic parameter init (roughly nn.Linear's uniform scale).
    lim1 = 1.0 / np.sqrt(C)
    lim2 = 1.0 / np.sqrt(hidden)
    w1 = jax.random.uniform(k1, (C, hidden), jnp.float32, -lim1, lim1)
    b1 = jax.random.uniform(k2, (hidden,), jnp.float32, -lim1, lim1)
    w2 = jax.random.uniform(k3, (hidden, C), jnp.float32, -lim2, lim2)
    b2 = jax.random.uniform(k4, (C,), jnp.float32, -lim2, lim2)

    ref = jax.block_until_ready(channel_gate_ref(x, w1, b1, w2, b2))

    out = channel_gate(x, w1, b1, w2, b2)
    out = jax.block_until_ready(out)

    assert out.shape == (B, C, H, W)
    np.testing.assert_allclose(np.asarray(out), np.asarray(ref), rtol=1e-5, atol=1e-5)

    print("KERNEL_OK")
</pallas_src>

<mosaic_0001>
module attributes {stable_mosaic.version = 11 : i64} {
  func.func @channel_gate_kernel(%arg0: i32, %arg1: memref<1x32x256xf32, #tpu.memory_space<vmem>>, %arg2: memref<32x2xf32, #tpu.memory_space<vmem>>, %arg3: memref<1x2xf32, #tpu.memory_space<vmem>>, %arg4: memref<32x2xf32, #tpu.memory_space<vmem>>, %arg5: memref<32x1xf32, #tpu.memory_space<vmem>>, %arg6: memref<1x32x256xf32, #tpu.memory_space<vmem>>) attributes {dimension_semantics = [#tpu.dimension_semantics<parallel>], iteration_bounds = array<i64: 2>, scalar_prefetch = 0 : i64, scratch_operands = 0 : i64, tpu.core_type = #tpu.core_type<tc>, window_params = [{transform_indices = @transform_0, window_bounds = array<i64: 1, 32, 256>}, {pipeline_mode = #tpu.pipeline_mode<synchronous>, transform_indices = @transform_1, window_bounds = array<i64: 32, 2>}, {pipeline_mode = #tpu.pipeline_mode<synchronous>, transform_indices = @transform_2, window_bounds = array<i64: 1, 2>}, {pipeline_mode = #tpu.pipeline_mode<synchronous>, transform_indices = @transform_3, window_bounds = array<i64: 32, 2>}, {pipeline_mode = #tpu.pipeline_mode<synchronous>, transform_indices = @transform_4, window_bounds = array<i64: 32, 1>}, {transform_indices = @transform_5, window_bounds = array<i64: 1, 32, 256>}]} {
    %c0 = arith.constant 0 : index
    %c0_0 = arith.constant 0 : index
    %c0_1 = arith.constant 0 : index
    %0 = vector.load %arg1[%c0, %c0_0, %c0_1] : memref<1x32x256xf32, #tpu.memory_space<vmem>>, vector<1x32x256xf32>
    %1 = vector.shape_cast %0 : vector<1x32x256xf32> to vector<32x256xf32>
    %cst = arith.constant dense<0.000000e+00> : vector<32xf32>
    %2 = vector.multi_reduction <add>, %1, %cst [1] : vector<32x256xf32> to vector<32xf32>
    %3 = vector.shape_cast %2 : vector<32xf32> to vector<32x1xf32>
    %cst_2 = arith.constant 2.560000e+02 : f32
    %4 = vector.broadcast %cst_2 : f32 to vector<32x1xf32>
    %5 = arith.divf %3, %4 : vector<32x1xf32>
    %cst_3 = arith.constant dense<0xFF800000> : vector<32xf32>
    %6 = vector.multi_reduction <maximumf>, %1, %cst_3 [1] : vector<32x256xf32> to vector<32xf32>
    %7 = vector.shape_cast %6 : vector<32xf32> to vector<32x1xf32>
    %c0_4 = arith.constant 0 : index
    %c0_5 = arith.constant 0 : index
    %8 = vector.load %arg2[%c0_4, %c0_5] : memref<32x2xf32, #tpu.memory_space<vmem>>, vector<32x2xf32>
    %c0_6 = arith.constant 0 : index
    %c0_7 = arith.constant 0 : index
    %9 = vector.load %arg3[%c0_6, %c0_7] : memref<1x2xf32, #tpu.memory_space<vmem>>, vector<1x2xf32>
    %c0_8 = arith.constant 0 : index
    %c0_9 = arith.constant 0 : index
    %10 = vector.load %arg4[%c0_8, %c0_9] : memref<32x2xf32, #tpu.memory_space<vmem>>, vector<32x2xf32>
    %c0_10 = arith.constant 0 : index
    %c0_11 = arith.constant 0 : index
    %11 = vector.load %arg5[%c0_10, %c0_11] : memref<32x1xf32, #tpu.memory_space<vmem>>, vector<32x1xf32>
    %12 = vector.broadcast %5 : vector<32x1xf32> to vector<32x2xf32>
    %13 = arith.mulf %8, %12 : vector<32x2xf32>
    %cst_12 = arith.constant dense<0.000000e+00> : vector<2xf32>
    %14 = vector.multi_reduction <add>, %13, %cst_12 [0] : vector<32x2xf32> to vector<2xf32>
    %15 = vector.shape_cast %14 : vector<2xf32> to vector<1x2xf32>
    %16 = vector.broadcast %7 : vector<32x1xf32> to vector<32x2xf32>
    %17 = arith.mulf %8, %16 : vector<32x2xf32>
    %cst_13 = arith.constant dense<0.000000e+00> : vector<2xf32>
    %18 = vector.multi_reduction <add>, %17, %cst_13 [0] : vector<32x2xf32> to vector<2xf32>
    %19 = vector.shape_cast %18 : vector<2xf32> to vector<1x2xf32>
    %20 = arith.addf %15, %9 : vector<1x2xf32>
    %cst_14 = arith.constant 0.000000e+00 : f32
    %21 = vector.broadcast %cst_14 : f32 to vector<1x2xf32>
    %22 = arith.maximumf %20, %21 : vector<1x2xf32>
    %23 = arith.addf %19, %9 : vector<1x2xf32>
    %cst_15 = arith.constant 0.000000e+00 : f32
    %24 = vector.broadcast %cst_15 : f32 to vector<1x2xf32>
    %25 = arith.maximumf %23, %24 : vector<1x2xf32>
    %26 = arith.addf %22, %25 : vector<1x2xf32>
    %27 = vector.broadcast %26 : vector<1x2xf32> to vector<32x2xf32>
    %28 = arith.mulf %10, %27 : vector<32x2xf32>
    %cst_16 = arith.constant dense<0.000000e+00> : vector<32xf32>
    %29 = vector.multi_reduction <add>, %28, %cst_16 [1] : vector<32x2xf32> to vector<32xf32>
    %30 = vector.shape_cast %29 : vector<32xf32> to vector<32x1xf32>
    %cst_17 = arith.constant 2.000000e+00 : f32
    %31 = vector.broadcast %cst_17 : f32 to vector<32x1xf32>
    %32 = arith.mulf %31, %11 : vector<32x1xf32>
    %33 = arith.addf %30, %32 : vector<32x1xf32>
    %34 = arith.negf %33 : vector<32x1xf32>
    %35 = math.exp %34 : vector<32x1xf32>
    %cst_18 = arith.constant 1.000000e+00 : f32
    %36 = vector.broadcast %cst_18 : f32 to vector<32x1xf32>
    %37 = arith.addf %36, %35 : vector<32x1xf32>
    %38 = arith.divf %36, %37 : vector<32x1xf32>
    %39 = vector.broadcast %38 : vector<32x1xf32> to vector<32x256xf32>
    %40 = arith.mulf %1, %39 : vector<32x256xf32>
    %c0_19 = arith.constant 0 : index
    %c0_20 = arith.constant 0 : index
    %c0_21 = arith.constant 0 : index
    %41 = vector.load %arg6[%c0_19, %c0_20, %c0_21] : memref<1x32x256xf32, #tpu.memory_space<vmem>>, vector<1x32x256xf32>
    %42 = vector.shape_cast %41 : vector<1x32x256xf32> to vector<32x256xf32>
    %43 = vector.shape_cast %40 : vector<32x256xf32> to vector<1x32x256xf32>
    tpu.vector_store %arg6[%c0_19, %c0_20, %c0_21], %43 {strides = array<i32>} : memref<1x32x256xf32, #tpu.memory_space<vmem>>, vector<1x32x256xf32>,
    return
  }
  func.func @transform_0(%arg0: i32) -> (i32, i32, i32) {
    %c0_i32 = arith.constant 0 : i32
    %c0_i32_0 = arith.constant 0 : i32
    %c0_i32_1 = arith.constant 0 : i32
    return %arg0, %c0_i32, %c0_i32_0 : i32, i32, i32
  }
  func.func @transform_1(%arg0: i32) -> (i32, i32) {
    %c0_i32 = arith.constant 0 : i32
    %c0_i32_0 = arith.constant 0 : i32
    %c0_i32_1 = arith.constant 0 : i32
    return %c0_i32, %c0_i32_0 : i32, i32
  }
  func.func @transform_2(%arg0: i32) -> (i32, i32) {
    %c0_i32 = arith.constant 0 : i32
    %c0_i32_0 = arith.constant 0 : i32
    %c0_i32_1 = arith.constant 0 : i32
    return %c0_i32, %c0_i32_0 : i32, i32
  }
  func.func @transform_3(%arg0: i32) -> (i32, i32) {
    %c0_i32 = arith.constant 0 : i32
    %c0_i32_0 = arith.constant 0 : i32
    %c0_i32_1 = arith.constant 0 : i32
    return %c0_i32, %c0_i32_0 : i32, i32
  }
  func.func @transform_4(%arg0: i32) -> (i32, i32) {
    %c0_i32 = arith.constant 0 : i32
    %c0_i32_0 = arith.constant 0 : i32
    %c0_i32_1 = arith.constant 0 : i32
    return %c0_i32, %c0_i32_0 : i32, i32
  }
  func.func @transform_5(%arg0: i32) -> (i32, i32, i32) {
    %c0_i32 = arith.constant 0 : i32
    %c0_i32_0 = arith.constant 0 : i32
    %c0_i32_1 = arith.constant 0 : i32
    return %arg0, %c0_i32, %c0_i32_0 : i32, i32, i32
  }
}

</mosaic_0001>

<llo_original>
// kernel: tpu_custom_call.1
$region0: #{tpu_custom_call.1}
  #allocation0 [shape = 'u32[]', space=smem, size = 0x4, offset = 0x4, fixed_abs, tag = 'smem constant byte address 0x4 - core index']
  #allocation1 [shape = 'u32[144,128]{1,0:T(1,128)}', space=vmem, size = 0x12000, scoped, tag = 'internal scratch']
  %s0 = inlined_call_operand.hbm [shape: f32[2,32,256], index: 0, kind: input, shape index: {}, may-alias: {0,5}]
  %s1 = inlined_call_operand.vmem [shape: f32[32,2], index: 1, kind: input, shape index: {}]
  %s2 = inlined_call_operand.vmem [shape: f32[1,2], index: 2, kind: input, shape index: {}]
  %s3 = inlined_call_operand.vmem [shape: f32[32,2], index: 3, kind: input, shape index: {}]
  %s4 = inlined_call_operand.vmem [shape: f32[32,1], index: 4, kind: input, shape index: {}]
  %s5 = inlined_call_operand.hbm [shape: f32[2,32,256], index: 5, kind: output, shape index: {}, may-alias: {0,5}]
  %s6 = sld [smem:[#allocation0]]
  $region57: #{tpu_custom_call.1} parent=0
    _
  %s8 = ssub.s32 1, %s6
  %s9 = scalar_select 0, %s8, %s6
  $region1: #{tpu_custom_call.1} parent=0
    #allocation2 [shape = 'u8[65536]{0}', space=vmem, size = 0x10000, scoped, tag = 'input window, operand 0']
    #allocation3 [shape = 's32[2]{0}', space=sflag, size = 0x8, scoped, tag = 'scoped memory for tpu_custom_call.1']
    #allocation4 [shape = 's32[2]{0}', space=sflag, size = 0x8, scoped, tag = 'scoped memory for tpu_custom_call.1']
    #allocation5 [shape = 'u8[65536]{0}', space=vmem, size = 0x10000, scoped, tag = 'output window, operand 0']
    %10 = vsyncpa [#allocation3], 0
    %s11 = scalar_lea.sflag [#allocation3], 1
    %12 = vsyncpa %s11, 0
    %13 = vsyncpa [#allocation4], 0
    %s14 = scalar_lea.sflag [#allocation4], 1
    %15 = vsyncpa %s14, 0
    loop: start=0, step=1, limit=4
    $region2: #{tpu_custom_call.1} parent=1 // loop_pre_header
      _
    $region3: #{tpu_custom_call.1} parent=1 // loop_header
      %s17 = sphi 0, %s21
      %p18 = scmp.ge.s32.totalorder %s17, 4
      %s27 = sphi 0, %s29
      %s30 = sphi 0, %s27
      %s31 = sphi 0, %s30
      %s47 = sphi 0, %s31
      %s51 = sphi 0, %s51
      %s53 = sphi 0, %s51
      %s54 = sphi 0, %s53
      %s68 = sphi 0, %s54
      %s72 = sphi 0, %s72
      %s74 = sphi 0, %s72
      %s75 = sphi 0, %s74
      %s89 = sphi 0, %s75
      %s93 = sphi 0, %s93
      %s95 = sphi 0, %s93
      %s96 = sphi 0, %s95
      %s110 = sphi 0, %s96
      %s114 = sphi 0, %s114
      %s116 = sphi 0, %s114
      %s117 = sphi 0, %s116
      %s131 = sphi 0, %s117
      %s137 = sphi 0, %s139
      %s140 = sphi 0, %s137
      %s141 = sphi 0, %s140
      %s157 = sphi 0, %s141
    $region4: #{tpu_custom_call.1} parent=1 // loop_header_branch
      %20 = sbr.rel (%p18) target = $region8
    $region5: #{tpu_custom_call.1} parent=1 // loop_body
      %s22 = ssub.s32 %s17, 1
      %s23 = ssub.s32 %s17, 2
      %s24 = sadd.s32 %s17, 1
      %s25 = ssub.s32 %s17, %s24
      %p26 = scmp.eq.s32.totalorder %s25, 0
      %s28 = sadd.s32 %s27, 1
      %s29 = scalar_select %p26, %s27, %s28
      %p32 = pneg %p26
      %p33 = scmp.eq.s32.totalorder %s17, 1
      %p34 = por %p32, %p33
      %p35 = scmp.ne.s32.totalorder %s27, %s30
      %p36 = scmp.eq.s32.totalorder %s17, 0
      %p37 = por %p35, %p36
      %p38 = scmp.ne.s32.totalorder %s27, %s30
      %p39 = scmp.eq.s32.totalorder %s22, 1
      %p40 = por %p38, %p39
      %p41 = scmp.ne.s32.totalorder %s30, %s31
      %p42 = scmp.eq.s32.totalorder %s22, 0
      %p43 = por %p41, %p42
      %p44 = scmp.ne.s32.totalorder %s30, %s31
      %p45 = scmp.eq.s32.totalorder %s23, 1
      %p46 = por %p44, %p45
      %p48 = scmp.ne.s32.totalorder %s31, %s47
      %p49 = scmp.eq.s32.totalorder %s23, 0
      %p50 = por %p48, %p49
      %s52 = sadd.s32 %s51, 1
      %p55 = scmp.eq.s32.totalorder %s17, 1
      %p56 = scmp.ne.s32.totalorder %s51, %s53
      %p57 = scmp.eq.s32.totalorder %s17, 0
      %p58 = por %p56, %p57
      %p59 = scmp.ne.s32.totalorder %s51, %s53
      %p60 = scmp.eq.s32.totalorder %s22, 1
      %p61 = por %p59, %p60
      %p62 = scmp.ne.s32.totalorder %s53, %s54
      %p63 = scmp.eq.s32.totalorder %s22, 0
      %p64 = por %p62, %p63
      %p65 = scmp.ne.s32.totalorder %s53, %s54
      %p66 = scmp.eq.s32.totalorder %s23, 1
      %p67 = por %p65, %p66
      %p69 = scmp.ne.s32.totalorder %s54, %s68
      %p70 = scmp.eq.s32.totalorder %s23, 0
      %p71 = por %p69, %p70
      %s73 = sadd.s32 %s72, 1
      %p76 = scmp.eq.s32.totalorder %s17, 1
      %p77 = scmp.ne.s32.totalorder %s72, %s74
      %p78 = scmp.eq.s32.totalorder %s17, 0
      %p79 = por %p77, %p78
      %p80 = scmp.ne.s32.totalorder %s72, %s74
      %p81 = scmp.eq.s32.totalorder %s22, 1
      %p82 = por %p80, %p81
      %p83 = scmp.ne.s32.totalorder %s74, %s75
      %p84 = scmp.eq.s32.totalorder %s22, 0
      %p85 = por %p83, %p84
      %p86 = scmp.ne.s32.totalorder %s74, %s75
      %p87 = scmp.eq.s32.totalorder %s23, 1
      %p88 = por %p86, %p87
      %p90 = scmp.ne.s32.totalorder %s75, %s89
      %p91 = scmp.eq.s32.totalorder %s23, 0
      %p92 = por %p90, %p91
      %s94 = sadd.s32 %s93, 1
      %p97 = scmp.eq.s32.totalorder %s17, 1
      %p98 = scmp.ne.s32.totalorder %s93, %s95
      %p99 = scmp.eq.s32.totalorder %s17, 0
      %p100 = por %p98, %p99
      %p101 = scmp.ne.s32.totalorder %s93, %s95
      %p102 = scmp.eq.s32.totalorder %s22, 1
      %p103 = por %p101, %p102
      %p104 = scmp.ne.s32.totalorder %s95, %s96
      %p105 = scmp.eq.s32.totalorder %s22, 0
      %p106 = por %p104, %p105
      %p107 = scmp.ne.s32.totalorder %s95, %s96
      %p108 = scmp.eq.s32.totalorder %s23, 1
      %p109 = por %p107, %p108
      %p111 = scmp.ne.s32.totalorder %s96, %s110
      %p112 = scmp.eq.s32.totalorder %s23, 0
      %p113 = por %p111, %p112
      %s115 = sadd.s32 %s114, 1
      %p118 = scmp.eq.s32.totalorder %s17, 1
      %p119 = scmp.ne.s32.totalorder %s114, %s116
      %p120 = scmp.eq.s32.totalorder %s17, 0
      %p121 = por %p119, %p120
      %p122 = scmp.ne.s32.totalorder %s114, %s116
      %p123 = scmp.eq.s32.totalorder %s22, 1
      %p124 = por %p122, %p123
      %p125 = scmp.ne.s32.totalorder %s116, %s117
      %p126 = scmp.eq.s32.totalorder %s22, 0
      %p127 = por %p125, %p126
      %p128 = scmp.ne.s32.totalorder %s116, %s117
      %p129 = scmp.eq.s32.totalorder %s23, 1
      %p130 = por %p128, %p129
      %p132 = scmp.ne.s32.totalorder %s117, %s131
      %p133 = scmp.eq.s32.totalorder %s23, 0
      %p134 = por %p132, %p133
      %s135 = ssub.s32 %s17, %s24
      %p136 = scmp.eq.s32.totalorder %s135, 0
      %s138 = sadd.s32 %s137, 1
      %s139 = scalar_select %p136, %s137, %s138
      %p142 = pneg %p136
      %p143 = scmp.eq.s32.totalorder %s17, 1
      %p144 = por %p142, %p143
      %p145 = scmp.ne.s32.totalorder %s137, %s140
      %p146 = scmp.eq.s32.totalorder %s17, 0
      %p147 = por %p145, %p146
      %p148 = scmp.ne.s32.totalorder %s137, %s140
      %p149 = scmp.eq.s32.totalorder %s22, 1
      %p150 = por %p148, %p149
      %p151 = scmp.ne.s32.totalorder %s140, %s141
      %p152 = scmp.eq.s32.totalorder %s22, 0
      %p153 = por %p151, %p152
      %p154 = scmp.ne.s32.totalorder %s140, %s141
      %p155 = scmp.eq.s32.totalorder %s23, 1
      %p156 = por %p154, %p155
      %p158 = scmp.ne.s32.totalorder %s141, %s157
      %p159 = scmp.eq.s32.totalorder %s23, 0
      %p160 = por %p158, %p159
      %p161 = scmp.le.s32.totalorder 1, %s17
      %p162 = scmp.lt.s32.totalorder %s17, 3
      %p163 = pnand %p161, %p162
      %p164 = pneg %p163
      // Predicated region
      $region9: #{tpu_custom_call.1} parent=5 // pred_check
        _
      $region10: #{tpu_custom_call.1} parent=5 // pred_check_branch
        %166 = sbr.rel (%p163) target = $region12
      $region11: #{tpu_custom_call.1} parent=5 // pred_region
        %s167 = ssub.s32 %s17, 1
        // Predicated region
        $region13: #{tpu_custom_call.1} parent=11 // pred_check
          %p168 = pneg %p64
        $region14: #{tpu_custom_call.1} parent=11 // pred_check_branch
          %170 = sbr.rel (%p168) target = $region16
        $region15: #{tpu_custom_call.1} parent=11 // pred_region
          _
        $region16: #{tpu_custom_call.1} parent=11 // pred_fallthru
          _
        // Predicated region
        $region17: #{tpu_custom_call.1} parent=11 // pred_check
          %p171 = pneg %p85
        $region18: #{tpu_custom_call.1} parent=11 // pred_check_branch
          %173 = sbr.rel (%p171) target = $region20
        $region19: #{tpu_custom_call.1} parent=11 // pred_region
          _
        $region20: #{tpu_custom_call.1} parent=11 // pred_fallthru
          _
        // Predicated region
        $region21: #{tpu_custom_call.1} parent=11 // pred_check
          %p174 = pneg %p106
        $region22: #{tpu_custom_call.1} parent=11 // pred_check_branch
          %176 = sbr.rel (%p174) target = $region24
        $region23: #{tpu_custom_call.1} parent=11 // pred_region
          _
        $region24: #{tpu_custom_call.1} parent=11 // pred_fallthru
          _
        // Predicated region
        $region25: #{tpu_custom_call.1} parent=11 // pred_check
          %p177 = pneg %p127
        $region26: #{tpu_custom_call.1} parent=11 // pred_check_branch
          %179 = sbr.rel (%p177) target = $region28
        $region27: #{tpu_custom_call.1} parent=11 // pred_region
          _
        $region28: #{tpu_custom_call.1} parent=11 // pred_fallthru
          _
      $region12: #{tpu_custom_call.1} parent=5 // pred_fallthru
        _
      %p180 = scmp.lt.s32.totalorder %s17, 2
      // Predicated region
      $region29: #{tpu_custom_call.1} parent=5 // pred_check
        %p181 = pneg %p180
      $region30: #{tpu_custom_call.1} parent=5 // pred_check_branch
        %183 = sbr.rel (%p181) target = $region32
      $region31: #{tpu_custom_call.1} parent=5 // pred_region
        // Predicated region
        $region33: #{tpu_custom_call.1} parent=31 // pred_check
          %p184 = pneg %p37
        $region34: #{tpu_custom_call.1} parent=31 // pred_check_branch
          %186 = sbr.rel (%p184) target = $region36
        $region35: #{tpu_custom_call.1} parent=31 // pred_region
          %s187 = sand.u32 %s27, 1
          %s188 = scalar_lea.sflag [#allocation3], %s187
          %s189 = sand.u32 %s27, 1
          %s190 = smul.addr %s189, 64
          %s191 = scalar_lea.vmem [#allocation2], %s190
          %s193 = ssub.s32 1024, 1024
          %194 = vsyncadd %s188, %s193
          %s195 = smul.addr %s17, 8
          %s196 = smul.addr %s195, 128
          %s197 = scalar_lea.hbm %s0, %s196
          %s198 = sshll.u32 %s191, 4
          %s199 = int_to_ptr.vmem [resolvable:$true] %s198
          %204 = dma.hbm_to_vmem [thread:$0]  %s197, 1024, %s199, %s188, 256, 256, 16
        $region36: #{tpu_custom_call.1} parent=31 // pred_fallthru
          _
      $region32: #{tpu_custom_call.1} parent=5 // pred_fallthru
        _
      %p205 = scmp.le.s32.totalorder 1, %s17
      %p206 = scmp.lt.s32.totalorder %s17, 3
      %p207 = pnand %p205, %p206
      %p208 = pneg %p207
      // Predicated region
      $region37: #{tpu_custom_call.1} parent=5 // pred_check
        _
      $region38: #{tpu_custom_call.1} parent=5 // pred_check_branch
        %210 = sbr.rel (%p207) target = $region40
      $region39: #{tpu_custom_call.1} parent=5 // pred_region
        %s211 = ssub.s32 %s17, 1
        %s212 = sand.u32 %s30, 1
        %s213 = scalar_lea.sflag [#allocation3], %s212
        %s214 = sand.u32 %s30, 1
        %s215 = smul.addr %s214, 64
        %s216 = scalar_lea.vmem [#allocation2], %s215
        // Predicated region
        $region41: #{tpu_custom_call.1} parent=39 // pred_check
          %p217 = pneg %p43
        $region42: #{tpu_custom_call.1} parent=39 // pred_check_branch
          %219 = sbr.rel (%p217) target = $region44
        $region43: #{tpu_custom_call.1} parent=39 // pred_region
          %220 = dma.done %s213, 1024
        $region44: #{tpu_custom_call.1} parent=39 // pred_fallthru
          _
        %s221 = sand.u32 %s30, 1
        %s222 = scalar_lea.sflag [#allocation3], %s221
        %s223 = sand.u32 %s30, 1
        %s224 = smul.addr %s223, 64
        %s225 = scalar_lea.vmem [#allocation2], %s224
        %p226 = pneg %p43
        %p227 = pneg %p40
        %p228 = pneg %p64
        %p229 = pneg %p61
        %p230 = pneg %p85
        %p231 = pneg %p82
        %p232 = pneg %p106
        %p233 = pneg %p103
        %p234 = pneg %p127
        %p235 = pneg %p124
        %p236 = pneg %p153
        %p237 = pneg %p150
        %s238 = sand.u32 %s140, 1
        %s239 = scalar_lea.sflag [#allocation4], %s238
        %s240 = sand.u32 %s140, 1
        %s241 = smul.addr %s240, 64
        %s242 = scalar_lea.vmem [#allocation5], %s241
        %v243 = vld [vmem:[%s216] sm:$0xff]
        %v244 = vld [vmem:[%s216 + $0x8] sm:$0xff]
        %v245 = vld [vmem:[%s216 + $0x10] sm:$0xff]
        %v246 = vld [vmem:[%s216 + $0x18] sm:$0xff]
        %v247 = vld [vmem:[%s216 + $0x20] sm:$0xff]
        %v248 = vld [vmem:[%s216 + $0x28] sm:$0xff]
        %v249 = vld [vmem:[%s216 + $0x30] sm:$0xff]
        %v250 = vld [vmem:[%s216 + $0x38] sm:$0xff]
        %v251 = vadd.f32 %v243, %v244
        %252 = vadd.xlane.f32.xlu0 %v251
        %v253 = vpop.xlane.xlu0 %252
        %v254 = vadd.f32 %v245, %v246
        %255 = vadd.xlane.f32.xlu0 %v254
        %v256 = vpop.xlane.xlu0 %255
        %v257 = vadd.f32 %v247, %v248
        %258 = vadd.xlane.f32.xlu0 %v257
        %v259 = vpop.xlane.xlu0 %258
        %v260 = vadd.f32 %v249, %v250
        %261 = vadd.xlane.f32.xlu0 %v260
        %v262 = vpop.xlane.xlu0 %261
        %v263 = vrcp.pop 256.0
        %v264 = vmul.f32 %v253, %v263
        %v265 = vmul.f32 %v256, %v263
        %v266 = vmul.f32 %v259, %v263
        %v267 = vmul.f32 %v262, %v263
        %v268 = vmax.f32 %v243, %v244
        %269 = vmax.xlane.f32.xlu0 %v268
        %v270 = vpop.xlane.xlu0 %269
        %v271 = vmax.f32 %v245, %v246
        %272 = vmax.xlane.f32.xlu0 %v271
        %v273 = vpop.xlane.xlu0 %272
        %v274 = vmax.f32 %v247, %v248
        %275 = vmax.xlane.f32.xlu0 %v274
        %v276 = vpop.xlane.xlu0 %275
        %v277 = vmax.f32 %v249, %v250
        %278 = vmax.xlane.f32.xlu0 %v277
        %v279 = vpop.xlane.xlu0 %278
        %v280 = vld [vmem:[%s1] sm:$0xff]
        %v281 = vld [vmem:[%s1 + $0x8] sm:$0xff]
        %v282 = vld [vmem:[%s1 + $0x10] sm:$0xff]
        %v283 = vld [vmem:[%s1 + $0x18] sm:$0xff]
        %v284 = vld [vmem:[%s2] sm:$0x1]
        %v285 = vld [vmem:[%s3] sm:$0xff]
        %v286 = vld [vmem:[%s3 + $0x8] sm:$0xff]
        %v287 = vld [vmem:[%s3 + $0x10] sm:$0xff]
        %v288 = vld [vmem:[%s3 + $0x18] sm:$0xff]
        %v289 = vld [vmem:[%s4] sm:$0xff]
        %v290 = vld [vmem:[%s4 + $0x8] sm:$0xff]
        %v291 = vld [vmem:[%s4 + $0x10] sm:$0xff]
        %v292 = vld [vmem:[%s4 + $0x18] sm:$0xff]
        %v293 = vmul.f32 %v280, %v264
        %v294 = vmul.f32 %v281, %v265
        %v295 = vmul.f32 %v282, %v266
        %v296 = vmul.f32 %v283, %v267
        %vm297 = vcmask 15360
        %v298 = vsel %vm297, %v293, 0.0
        %v299 = vsel %vm297, %v294, 0.0
        %v300 = vadd.f32 %v298, %v299
        %v301 = vsel %vm297, %v295, 0.0
        %v302 = vadd.f32 %v300, %v301
        %v303 = vsel %vm297, %v296, 0.0
        %v304 = vadd.f32 %v302, %v303
        %v305 = vrot.slane %v304, 4
        %v306 = vadd.f32 %v304, %v305
        %v307 = vrot.slane %v306, 2
        %v308 = vadd.f32 %v306, %v307
        %v309 = vrot.slane %v308, 1
        %v310 = vadd.f32 %v308, %v309
        %v311 = vmul.f32 %v280, %v270
        %v312 = vmul.f32 %v281, %v273
        %v313 = vmul.f32 %v282, %v276
        %v314 = vmul.f32 %v283, %v279
        %v315 = vsel %vm297, %v311, 0.0
        %v316 = vsel %vm297, %v312, 0.0
        %v317 = vadd.f32 %v315, %v316
        %v318 = vsel %vm297, %v313, 0.0
        %v319 = vadd.f32 %v317, %v318
        %v320 = vsel %vm297, %v314, 0.0
        %v321 = vadd.f32 %v319, %v320
        %v322 = vrot.slane %v321, 4
        %v323 = vadd.f32 %v321, %v322
        %v324 = vrot.slane %v323, 2
        %v325 = vadd.f32 %v323, %v324
        %v326 = vrot.slane %v325, 1
        %v327 = vadd.f32 %v325, %v326
        %v328 = vadd.f32 %v310, %v284
        %v329 = vmax.f32 %v328, 0.0
        %v330 = vadd.f32 %v327, %v284
        %v331 = vmax.f32 %v330, 0.0
        %v332 = vadd.f32 %v329, %v331
        %v333 = vlaneseq
        %v334 = vshrl.u32 %v333, 7
        %v335 = vsub.s32 0, %v334
        %v336 = vrot.slane %v332, %v335
        %v337 = vmul.f32 %v285, %v336
        %v338 = vmul.f32 %v286, %v336
        %v339 = vmul.f32 %v287, %v336
        %v340 = vmul.f32 %v288, %v336
        %v341 = vsel %vm297, %v337, 0.0
        %342 = vadd.xlane.f32.xlu0 %v341
        %v343 = vpop.xlane.xlu0 %342
        %v344 = vsel %vm297, %v338, 0.0
        %345 = vadd.xlane.f32.xlu0 %v344
        %v346 = vpop.xlane.xlu0 %345
        %v347 = vsel %vm297, %v339, 0.0
        %348 = vadd.xlane.f32.xlu0 %v347
        %v349 = vpop.xlane.xlu0 %348
        %v350 = vsel %vm297, %v340, 0.0
        %351 = vadd.xlane.f32.xlu0 %v350
        %v352 = vpop.xlane.xlu0 %351
        %v353 = vmul.f32 %v289, 2.0
        %v354 = vmul.f32 %v290, 2.0
        %v355 = vmul.f32 %v291, 2.0
        %v356 = vmul.f32 %v292, 2.0
        %v357 = vadd.f32 %v343, %v353
        %v358 = vadd.f32 %v346, %v354
        %v359 = vadd.f32 %v349, %v355
        %v360 = vadd.f32 %v352, %v356
        %v361 = vxor.u32 %v357, 2147483648
        %v362 = vxor.u32 %v358, 2147483648
        %v363 = vxor.u32 %v359, 2147483648
        %v364 = vxor.u32 %v360, 2147483648
        %v365 = vmul.f32 %v361, 1.442695
        %v366 = vpow.pop %v365
        %v367 = vmul.f32 %v362, 1.442695
        %v368 = vpow.pop %v367
        %v369 = vmul.f32 %v363, 1.442695
        %v370 = vpow.pop %v369
        %v371 = vmul.f32 %v364, 1.442695
        %v372 = vpow.pop %v371
        %v373 = vadd.f32 %v366, 1.0
        %v374 = vadd.f32 %v368, 1.0
        %v375 = vadd.f32 %v370, 1.0
        %v376 = vadd.f32 %v372, 1.0
        %v377 = vrcp.pop %v373
        %v378 = vmul.f32 1.0, %v377
        %v379 = vrcp.pop %v374
        %v380 = vmul.f32 1.0, %v379
        %v381 = vrcp.pop %v375
        %v382 = vmul.f32 1.0, %v381
        %v383 = vrcp.pop %v376
        %v384 = vmul.f32 1.0, %v383
        %386 = vset.pattern.permute.xlu0 0
        %387 = vperm.xlu0 %386, %v378
        %v388 = vpop.permute.xlu0 %387
        %391 = vset.pattern.permute.xlu0 0
        %392 = vperm.xlu0 %391, %v380
        %v393 = vpop.permute.xlu0 %392
        %396 = vset.pattern.permute.xlu0 0
        %397 = vperm.xlu0 %396, %v382
        %v398 = vpop.permute.xlu0 %397
        %401 = vset.pattern.permute.xlu0 0
        %402 = vperm.xlu0 %401, %v384
        %v403 = vpop.permute.xlu0 %402
        %v405 = vmul.f32 %v243, %v388
        %v406 = vmul.f32 %v244, %v388
        %v407 = vmul.f32 %v245, %v393
        %v408 = vmul.f32 %v246, %v393
        %v409 = vmul.f32 %v247, %v398
        %v410 = vmul.f32 %v248, %v398
        %v411 = vmul.f32 %v249, %v403
        %v412 = vmul.f32 %v250, %v403
        %413 = vst [vmem:[%s242] sm:$0xff] %v405
        %414 = vst [vmem:[%s242 + $0x8] sm:$0xff] %v406
        %415 = vst [vmem:[%s242 + $0x10] sm:$0xff] %v407
        %416 = vst [vmem:[%s242 + $0x18] sm:$0xff] %v408
        %417 = vst [vmem:[%s242 + $0x20] sm:$0xff] %v409
        %418 = vst [vmem:[%s242 + $0x28] sm:$0xff] %v410
        %419 = vst [vmem:[%s242 + $0x30] sm:$0xff] %v411
        %420 = vst [vmem:[%s242 + $0x38] sm:$0xff] %v412
        %s421 = sand.u32 %s140, 1
        %s422 = scalar_lea.sflag [#allocation4], %s421
        %s423 = sand.u32 %s140, 1
        %s424 = smul.addr %s423, 64
        %s425 = scalar_lea.vmem [#allocation5], %s424
        // Predicated region
        $region45: #{tpu_custom_call.1} parent=39 // pred_check
          %p426 = pneg %p150
        $region46: #{tpu_custom_call.1} parent=39 // pred_check_branch
          %428 = sbr.rel (%p426) target = $region48
        $region47: #{tpu_custom_call.1} parent=39 // pred_region
          %s430 = ssub.s32 1024, 1024
          %431 = vsyncadd %s422, %s430
          %s432 = smul.addr %s22, 8
          %s433 = smul.addr %s432, 128
          %s434 = scalar_lea.hbm %s5, %s433
          %s435 = sshll.u32 %s425, 4
          %s436 = int_to_ptr.vmem [resolvable:$true] %s435
          %441 = dma.vmem_to_hbm [thread:$0]  %s436, 1024, %s434, %s422, 256, 256, 16
        $region48: #{tpu_custom_call.1} parent=39 // pred_fallthru
          _
      $region40: #{tpu_custom_call.1} parent=5 // pred_fallthru
        _
      %p442 = scmp.le.s32.totalorder 2, %s17
      // Predicated region
      $region49: #{tpu_custom_call.1} parent=5 // pred_check
        %p443 = pneg %p442
      $region50: #{tpu_custom_call.1} parent=5 // pred_check_branch
        %445 = sbr.rel (%p443) target = $region52
      $region51: #{tpu_custom_call.1} parent=5 // pred_region
        %s446 = ssub.s32 %s17, 2
        // Predicated region
        $region53: #{tpu_custom_call.1} parent=51 // pred_check
          %p447 = pneg %p156
        $region54: #{tpu_custom_call.1} parent=51 // pred_check_branch
          %449 = sbr.rel (%p447) target = $region56
        $region55: #{tpu_custom_call.1} parent=51 // pred_region
          %s450 = sand.u32 %s141, 1
          %s451 = scalar_lea.sflag [#allocation4], %s450
          %s452 = sand.u32 %s141, 1
          %s453 = smul.addr %s452, 64
          %s454 = scalar_lea.vmem [#allocation5], %s453
          %455 = dma.done %s451, 1024
        $region56: #{tpu_custom_call.1} parent=51 // pred_fallthru
          _
      $region52: #{tpu_custom_call.1} parent=5 // pred_fallthru
        _
    $region6: #{tpu_custom_call.1} parent=1 // loop_footer
      %s21 = sadd.s32 1, %s17
    $region7: #{tpu_custom_call.1} parent=1 // loop_footer_branch
      %16 = sbr.rel target = $region3
    $region8: #{tpu_custom_call.1} parent=1 // loop_exit
      _
    %456 = vsyncpa [#allocation3], 1
    %s457 = scalar_lea.sflag [#allocation3], 1
    %458 = vsyncpa %s457, 1
    %459 = vsyncpa [#allocation4], 1
    %s460 = scalar_lea.sflag [#allocation4], 1
    %461 = vsyncpa %s460, 1

</llo_original>
